<compile_context>
chip_gen: v7x
topology: tpu7x:2x2x1
jax: 0.10.0
libtpu: 0.0.40
codegen_flags: <defaults>
</compile_context>

<pallas_src>
import jax
import jax.numpy as jnp
from jax.experimental import pallas as pl
from jax.experimental.pallas import tpu as pltpu

_TARGET_BLOCK_BYTES = 3 * 1024 * 1024   # ~3 MiB input block (v6e/v7x sweet spot)
_MIN_SPLIT_BYTES = 512 * 1024           # below this, splitting a lone channel isn't worth it
_VMEM_FLOOR = 16 * 1024 * 1024
_VMEM_CAP = 48 * 1024 * 1024            # stay inside v7x's 64 MiB/TC physical VMEM


def _halo_rows(itemsize):
    """Sublane-packing-aligned halo: 8 rows f32, 16 bf16, 32 int8/fp8."""
    return max(8, 32 // max(int(itemsize), 1))


def _block_highpass(x, above):
    """High-pass of one (Cb, Ht, W) f32 block given the (Cb, 1, W) row above it.

    `above` is already reflect-resolved.  Returns the full block so the caller
    can issue ONE dense, aligned store.
    """
    ht, w = x.shape[1], x.shape[2]
    # Row difference e[:, i, :] = x[:, R(i-1), :] - x[:, i, :].
    x_up = jnp.concatenate([above, x[:, : ht - 1, :]], axis=1)
    e = x_up - x
    # Column difference y[..., j] = e[..., R(j-1)] - e[..., j]; the reflect
    # column (j=0 -> e[..., 1]) is concatenated directly, so no wrap-around,
    # iota or where fixup is needed and the output store stays dense.
    e_left = jnp.concatenate([e[:, :, 1:2], e[:, :, : w - 1]], axis=2)
    return e_left - e


def _hp_kernel_whole(x_ref, o_ref):
    """Block = whole channel(s): (Cb, H, W)."""
    x = x_ref[...].astype(jnp.float32)
    above = x[:, 1:2, :]                       # reflect: row above row 0 is row 1
    o_ref[...] = _block_highpass(x, above).astype(o_ref.dtype)


def _hp_kernel_tiled(x_ref, halo_ref, o_ref):
    """Block = (Cb, Ht, W) row tile; halo_ref holds rows [r*Ht - halo, r*Ht)."""
    x = x_ref[...].astype(jnp.float32)
    hs = halo_ref.shape[1]
    halo_row = halo_ref[:, hs - 1:hs, :].astype(jnp.float32)   # row r*Ht - 1
    # Reflect only at the top of the image; otherwise use the halo row.
    above = jnp.where(pl.program_id(1) == 0, x[:, 1:2, :], halo_row)
    o_ref[...] = _block_highpass(x, above).astype(o_ref.dtype)


def _choose_tiles(C, H, W, itemsize, target_bytes):
    """Pick (channels_per_block, rows_per_block, halo_rows)."""
    halo = _halo_rows(itemsize)
    row_bytes = W * itemsize
    ch_bytes = H * row_bytes
    can_tile_rows = H >= 2 * halo

    need_row_tiling = can_tile_rows and (
        ch_bytes > target_bytes                        # one channel exceeds the block target
        or (C == 1 and ch_bytes > _MIN_SPLIT_BYTES)    # expose >= 2 blocks for megacore
    )

    if not need_row_tiling:
        # Whole channels per block; group channels up to the byte target but keep
        # >= 2 grid points along C when possible (v7x has 2 TensorCores).
        cb = max(1, min(C, target_bytes // max(ch_bytes, 1)))
        if C > 1:
            cb = min(cb, (C + 1) // 2)
        return int(cb), H, halo

    # Row-tiled path: one channel per block, rows aligned to the packed-sublane
    # count so the halo block offsets and the stores stay dense.
    # TODO(synk): add W (lane-axis) tiling for short-and-extremely-wide images
    # whose single `halo`-row strip still exceeds the VMEM budget.
    rows = (target_bytes // max(row_bytes, 1)) // halo * halo
    rows = max(halo, min(rows, (H // halo) * halo))
    if C == 1:
        rows = min(rows, max(halo, ((H // 2) // halo) * halo))   # >= 2 row tiles
    return 1, int(rows), halo


def _vmem_limit_bytes(cb, ht, W, halo, itemsize, tiled):
    """Scoped-VMEM limit from the real footprint (double-buffered I/O + temps)."""
    blk = cb * ht * W
    io = 2 * 2 * blk * itemsize                  # double-buffered main input + output
    if tiled:
        io += 2 * cb * halo * W * itemsize       # double-buffered halo block
    temps = 6 * blk * 4                          # generous f32 in-kernel temporaries
    return int(min(max(io + temps + (2 << 20), _VMEM_FLOOR), _VMEM_CAP))


def highpass(x, *, target_block_bytes=_TARGET_BLOCK_BYTES):
    """x: (C, H, W) -> (C, H, W), matching HighPass.forward."""
    C, H, W = x.shape
    if H < 2 or W < 2:
        raise ValueError("reflect padding needs H >= 2 and W >= 2")
    itemsize = jnp.dtype(x.dtype).itemsize
    cb, ht, halo = _choose_tiles(C, H, W, itemsize, target_block_bytes)

    cost = pl.CostEstimate(flops=4 * C * H * W, transcendentals=0,
                           bytes_accessed=2 * C * H * W * itemsize)
    out_shape = jax.ShapeDtypeStruct((C, H, W), x.dtype)

    if ht == H:
        # Whole-channel blocks, 1-D grid over channel groups.
        return pl.pallas_call(
            _hp_kernel_whole,
            out_shape=out_shape,
            grid_spec=pltpu.PrefetchScalarGridSpec(
                num_scalar_prefetch=0,
                grid=(pl.cdiv(C, cb),),
                in_specs=[pl.BlockSpec((cb, H, W), lambda c: (c, 0, 0))],
                out_specs=pl.BlockSpec((cb, H, W), lambda c: (c, 0, 0)),
            ),
            compiler_params=pltpu.CompilerParams(
                dimension_semantics=("parallel",),
                vmem_limit_bytes=_vmem_limit_bytes(cb, H, W, halo, itemsize, False)),
            cost_estimate=cost,
        )(x)

    # Row-tiled path: main block + a dtype-aware halo block carrying the row above.
    hblk = ht // halo    # row tile expressed in halo-block units (ht % halo == 0)
    return pl.pallas_call(
        _hp_kernel_tiled,
        out_shape=out_shape,
        grid_spec=pltpu.PrefetchScalarGridSpec(
            num_scalar_prefetch=0,
            grid=(pl.cdiv(C, cb), pl.cdiv(H, ht)),
            in_specs=[
                pl.BlockSpec((cb, ht, W), lambda c, r: (c, r, 0)),
                # Halo covers rows [r*ht - halo, r*ht); its last row is the row
                # above the tile (unused filler when r == 0, where we reflect).
                pl.BlockSpec((cb, halo, W),
                             lambda c, r: (c, jnp.maximum(r * hblk - 1, 0), 0)),
            ],
            out_specs=pl.BlockSpec((cb, ht, W), lambda c, r: (c, r, 0)),
        ),
        compiler_params=pltpu.CompilerParams(
            dimension_semantics=("parallel", "parallel"),
            vmem_limit_bytes=_vmem_limit_bytes(cb, ht, W, halo, itemsize, True)),
        cost_estimate=cost,
    )(x, x)


def _reference(x):
    """Pure-JAX reference mirroring the PyTorch forward."""
    C, H, W = x.shape
    p = jnp.pad(x, ((0, 0), (1, 1), (1, 1)), mode="reflect")
    return (p[:, 0:H, 0:W] - p[:, 0:H, 1:W + 1]
            - p[:, 1:H + 1, 0:W] + p[:, 1:H + 1, 1:W + 1])


if __name__ == "__main__":
    key = jax.random.PRNGKey(0)
    k0, k1, k2 = jax.random.split(key, 3)

    # Shape implied by the module: one image, C=4, 16x16 -> whole-channel path,
    # channels grouped 2 per block (2 grid points for megacore).
    x = jax.random.normal(k0, (4, 16, 16), dtype=jnp.float32)
    y = highpass(x)
    jax.block_until_ready(y)
    assert y.shape == x.shape
    assert jnp.allclose(y, _reference(x), atol=1e-5, rtol=1e-5)

    # Row-tiled halo path: ragged H (40 = 16+16+8) and lane-aligned W=256 with a
    # forced small block budget.
    x2 = jax.random.normal(k1, (3, 40, 256), dtype=jnp.float32)
    y2 = highpass(x2, target_block_bytes=16 * 256 * 4)
    jax.block_until_ready(y2)
    assert jnp.allclose(y2, _reference(x2), atol=1e-5, rtol=1e-5)

    # Single-channel image big enough that it is split into >= 2 row tiles so
    # both v7x TensorCores get work.
    x3 = jax.random.normal(k2, (1, 512, 512), dtype=jnp.float32)
    y3 = highpass(x3)
    jax.block_until_ready(y3)
    assert jnp.allclose(y3, _reference(x3), atol=1e-5, rtol=1e-5)

    print("KERNEL_OK")
</pallas_src>

<mosaic_0001>
module attributes {stable_mosaic.version = 11 : i64} {
  func.func @_hp_kernel_whole(%arg0: i32, %arg1: memref<2x16x16xf32, #tpu.memory_space<vmem>>, %arg2: memref<2x16x16xf32, #tpu.memory_space<vmem>>) attributes {dimension_semantics = [#tpu.dimension_semantics<parallel>], iteration_bounds = array<i64: 2>, scalar_prefetch = 0 : i64, scratch_operands = 0 : i64, tpu.core_type = #tpu.core_type<tc>, window_params = [{transform_indices = @transform_0, window_bounds = array<i64: 2, 16, 16>}, {transform_indices = @transform_1, window_bounds = array<i64: 2, 16, 16>}]} {
    %c0 = arith.constant 0 : index
    %c0_0 = arith.constant 0 : index
    %c0_1 = arith.constant 0 : index
    %0 = vector.load %arg1[%c0, %c0_0, %c0_1] : memref<2x16x16xf32, #tpu.memory_space<vmem>>, vector<2x16x16xf32>
    %1 = vector.extract_strided_slice %0 {offsets = [0, 1, 0], sizes = [2, 1, 16], strides = [1, 1, 1]} : vector<2x16x16xf32> to vector<2x1x16xf32>
    %2 = vector.extract_strided_slice %0 {offsets = [0, 0, 0], sizes = [2, 15, 16], strides = [1, 1, 1]} : vector<2x16x16xf32> to vector<2x15x16xf32>
    %3 = tpu.concatenate %1, %2 in 1 : vector<2x1x16xf32>, vector<2x15x16xf32> -> vector<2x16x16xf32>
    %4 = arith.subf %3, %0 : vector<2x16x16xf32>
    %5 = vector.extract_strided_slice %4 {offsets = [0, 0, 1], sizes = [2, 16, 1], strides = [1, 1, 1]} : vector<2x16x16xf32> to vector<2x16x1xf32>
    %6 = vector.extract_strided_slice %4 {offsets = [0, 0, 0], sizes = [2, 16, 15], strides = [1, 1, 1]} : vector<2x16x16xf32> to vector<2x16x15xf32>
    %7 = tpu.concatenate %5, %6 in 2 : vector<2x16x1xf32>, vector<2x16x15xf32> -> vector<2x16x16xf32>
    %8 = arith.subf %7, %4 : vector<2x16x16xf32>
    %c0_2 = arith.constant 0 : index
    %c0_3 = arith.constant 0 : index
    %c0_4 = arith.constant 0 : index
    %9 = vector.load %arg2[%c0_2, %c0_3, %c0_4] : memref<2x16x16xf32, #tpu.memory_space<vmem>>, vector<2x16x16xf32>
    tpu.vector_store %arg2[%c0_2, %c0_3, %c0_4], %8 {strides = array<i32>} : memref<2x16x16xf32, #tpu.memory_space<vmem>>, vector<2x16x16xf32>,
    return
  }
  func.func @transform_0(%arg0: i32) -> (i32, i32, i32) {
    %c0_i32 = arith.constant 0 : i32
    %c0_i32_0 = arith.constant 0 : i32
    %c0_i32_1 = arith.constant 0 : i32
    return %arg0, %c0_i32, %c0_i32_0 : i32, i32, i32
  }
  func.func @transform_1(%arg0: i32) -> (i32, i32, i32) {
    %c0_i32 = arith.constant 0 : i32
    %c0_i32_0 = arith.constant 0 : i32
    %c0_i32_1 = arith.constant 0 : i32
    return %arg0, %c0_i32, %c0_i32_0 : i32, i32, i32
  }
}

</mosaic_0001>

<llo_original>
// kernel: tpu_custom_call.1
$region0: #{tpu_custom_call.1}
  #allocation0 [shape = 'u32[]', space=smem, size = 0x4, offset = 0x4, fixed_abs, tag = 'smem constant byte address 0x4 - core index']
  #allocation1 [shape = 'u32[144,128]{1,0:T(1,128)}', space=vmem, size = 0x12000, scoped, tag = 'internal scratch']
  %s0 = inlined_call_operand.hbm [shape: f32[4,16,16], index: 0, kind: input, shape index: {}]
  %s1 = inlined_call_operand.hbm [shape: f32[4,16,16], index: 1, kind: output, shape index: {}]
  %s2 = sld [smem:[#allocation0]]
  $region41: #{tpu_custom_call.1} parent=0
    _
  %s4 = ssub.s32 1, %s2
  %s5 = scalar_select 0, %s4, %s2
  $region1: #{tpu_custom_call.1} parent=0
    #allocation2 [shape = 'u8[32768]{0}', space=vmem, size = 0x8000, scoped, tag = 'input window, operand 0']
    #allocation3 [shape = 's32[2]{0}', space=sflag, size = 0x8, scoped, tag = 'scoped memory for tpu_custom_call.1']
    #allocation4 [shape = 's32[2]{0}', space=sflag, size = 0x8, scoped, tag = 'scoped memory for tpu_custom_call.1']
    #allocation5 [shape = 'u8[32768]{0}', space=vmem, size = 0x8000, scoped, tag = 'output window, operand 0']
    %6 = vsyncpa [#allocation3], 0
    %s7 = scalar_lea.sflag [#allocation3], 1
    %8 = vsyncpa %s7, 0
    %9 = vsyncpa [#allocation4], 0
    %s10 = scalar_lea.sflag [#allocation4], 1
    %11 = vsyncpa %s10, 0
    loop: start=0, step=1, limit=4
    $region2: #{tpu_custom_call.1} parent=1 // loop_pre_header
      _
    $region3: #{tpu_custom_call.1} parent=1 // loop_header
      %s13 = sphi 0, %s17
      %p14 = scmp.ge.s32.totalorder %s13, 4
      %s23 = sphi 0, %s25
      %s26 = sphi 0, %s23
      %s27 = sphi 0, %s26
      %s43 = sphi 0, %s27
      %s49 = sphi 0, %s51
      %s52 = sphi 0, %s49
      %s53 = sphi 0, %s52
      %s69 = sphi 0, %s53
    $region4: #{tpu_custom_call.1} parent=1 // loop_header_branch
      %16 = sbr.rel (%p14) target = $region8
    $region5: #{tpu_custom_call.1} parent=1 // loop_body
      %s18 = ssub.s32 %s13, 1
      %s19 = ssub.s32 %s13, 2
      %s20 = sadd.s32 %s13, 1
      %s21 = ssub.s32 %s13, %s20
      %p22 = scmp.eq.s32.totalorder %s21, 0
      %s24 = sadd.s32 %s23, 1
      %s25 = scalar_select %p22, %s23, %s24
      %p28 = pneg %p22
      %p29 = scmp.eq.s32.totalorder %s13, 1
      %p30 = por %p28, %p29
      %p31 = scmp.ne.s32.totalorder %s23, %s26
      %p32 = scmp.eq.s32.totalorder %s13, 0
      %p33 = por %p31, %p32
      %p34 = scmp.ne.s32.totalorder %s23, %s26
      %p35 = scmp.eq.s32.totalorder %s18, 1
      %p36 = por %p34, %p35
      %p37 = scmp.ne.s32.totalorder %s26, %s27
      %p38 = scmp.eq.s32.totalorder %s18, 0
      %p39 = por %p37, %p38
      %p40 = scmp.ne.s32.totalorder %s26, %s27
      %p41 = scmp.eq.s32.totalorder %s19, 1
      %p42 = por %p40, %p41
      %p44 = scmp.ne.s32.totalorder %s27, %s43
      %p45 = scmp.eq.s32.totalorder %s19, 0
      %p46 = por %p44, %p45
      %s47 = ssub.s32 %s13, %s20
      %p48 = scmp.eq.s32.totalorder %s47, 0
      %s50 = sadd.s32 %s49, 1
      %s51 = scalar_select %p48, %s49, %s50
      %p54 = pneg %p48
      %p55 = scmp.eq.s32.totalorder %s13, 1
      %p56 = por %p54, %p55
      %p57 = scmp.ne.s32.totalorder %s49, %s52
      %p58 = scmp.eq.s32.totalorder %s13, 0
      %p59 = por %p57, %p58
      %p60 = scmp.ne.s32.totalorder %s49, %s52
      %p61 = scmp.eq.s32.totalorder %s18, 1
      %p62 = por %p60, %p61
      %p63 = scmp.ne.s32.totalorder %s52, %s53
      %p64 = scmp.eq.s32.totalorder %s18, 0
      %p65 = por %p63, %p64
      %p66 = scmp.ne.s32.totalorder %s52, %s53
      %p67 = scmp.eq.s32.totalorder %s19, 1
      %p68 = por %p66, %p67
      %p70 = scmp.ne.s32.totalorder %s53, %s69
      %p71 = scmp.eq.s32.totalorder %s19, 0
      %p72 = por %p70, %p71
      %p73 = scmp.le.s32.totalorder 1, %s13
      %p74 = scmp.lt.s32.totalorder %s13, 3
      %p75 = pnand %p73, %p74
      %p76 = pneg %p75
      // Predicated region
      $region9: #{tpu_custom_call.1} parent=5 // pred_check
        _
      $region10: #{tpu_custom_call.1} parent=5 // pred_check_branch
        %78 = sbr.rel (%p75) target = $region12
      $region11: #{tpu_custom_call.1} parent=5 // pred_region
        %s79 = ssub.s32 %s13, 1
      $region12: #{tpu_custom_call.1} parent=5 // pred_fallthru
        _
      %p80 = scmp.lt.s32.totalorder %s13, 2
      // Predicated region
      $region13: #{tpu_custom_call.1} parent=5 // pred_check
        %p81 = pneg %p80
      $region14: #{tpu_custom_call.1} parent=5 // pred_check_branch
        %83 = sbr.rel (%p81) target = $region16
      $region15: #{tpu_custom_call.1} parent=5 // pred_region
        // Predicated region
        $region17: #{tpu_custom_call.1} parent=15 // pred_check
          %p84 = pneg %p33
        $region18: #{tpu_custom_call.1} parent=15 // pred_check_branch
          %86 = sbr.rel (%p84) target = $region20
        $region19: #{tpu_custom_call.1} parent=15 // pred_region
          %s87 = sand.u32 %s23, 1
          %s88 = scalar_lea.sflag [#allocation3], %s87
          %s89 = sand.u32 %s23, 1
          %s90 = smul.addr %s89, 32
          %s91 = scalar_lea.vmem [#allocation2], %s90
          %s92 = smul.u32 2, %s13
          %s94 = ssub.s32 512, 512
          %95 = vsyncadd %s88, %s94
          %s96 = smul.addr %s92, 2
          %s97 = smul.addr %s96, 128
          %s98 = scalar_lea.hbm %s0, %s97
          %s99 = sshll.u32 %s91, 4
          %s100 = int_to_ptr.vmem [resolvable:$true] %s99
          %105 = dma.hbm_to_vmem [thread:$0]  %s98, 512, %s100, %s88, 128, 128, 8
        $region20: #{tpu_custom_call.1} parent=15 // pred_fallthru
          _
      $region16: #{tpu_custom_call.1} parent=5 // pred_fallthru
        _
      %p106 = scmp.le.s32.totalorder 1, %s13
      %p107 = scmp.lt.s32.totalorder %s13, 3
      %p108 = pnand %p106, %p107
      %p109 = pneg %p108
      // Predicated region
      $region21: #{tpu_custom_call.1} parent=5 // pred_check
        _
      $region22: #{tpu_custom_call.1} parent=5 // pred_check_branch
        %111 = sbr.rel (%p108) target = $region24
      $region23: #{tpu_custom_call.1} parent=5 // pred_region
        %s112 = ssub.s32 %s13, 1
        %s113 = sand.u32 %s26, 1
        %s114 = scalar_lea.sflag [#allocation3], %s113
        %s115 = sand.u32 %s26, 1
        %s116 = smul.addr %s115, 32
        %s117 = scalar_lea.vmem [#allocation2], %s116
        // Predicated region
        $region25: #{tpu_custom_call.1} parent=23 // pred_check
          %p118 = pneg %p39
        $region26: #{tpu_custom_call.1} parent=23 // pred_check_branch
          %120 = sbr.rel (%p118) target = $region28
        $region27: #{tpu_custom_call.1} parent=23 // pred_region
          %121 = dma.done %s114, 512
        $region28: #{tpu_custom_call.1} parent=23 // pred_fallthru
          _
        %s122 = sand.u32 %s26, 1
        %s123 = scalar_lea.sflag [#allocation3], %s122
        %s124 = sand.u32 %s26, 1
        %s125 = smul.addr %s124, 32
        %s126 = scalar_lea.vmem [#allocation2], %s125
        %p127 = pneg %p39
        %p128 = pneg %p36
        %p129 = pneg %p65
        %p130 = pneg %p62
        %s131 = sand.u32 %s52, 1
        %s132 = scalar_lea.sflag [#allocation4], %s131
        %s133 = sand.u32 %s52, 1
        %s134 = smul.addr %s133, 32
        %s135 = scalar_lea.vmem [#allocation5], %s134
        %s136 = smul.u32 2, %s18
        %s137 = smul.u32 2, %s18
        %v138 = vld [vmem:[%s117] sm:$0xff]
        %v139 = vld [vmem:[%s117 + $0x8] sm:$0xff]
        %v140 = vld [vmem:[%s117 + $0x10] sm:$0xff]
        %v141 = vld [vmem:[%s117 + $0x18] sm:$0xff]
        %v144 = vrot.slane %v138, 1
        %v145 = vrot.slane %v140, 1
        %vm150 = vcmask 1040384
        %v151 = vrot.slane %v138, 7
        %v152 = vrot.slane %v139, 7
        %v153 = vsel %vm150, %v151, %v152
        %v154 = vrot.slane %v140, 7
        %v155 = vrot.slane %v141, 7
        %v156 = vsel %vm150, %v154, %v155
        %v161 = vsel %vm150, %v144, %v151
        %v162 = vsel %vm150, %v145, %v154
        %v163 = vsub.f32 %v161, %v138
        %v164 = vsub.f32 %v153, %v139
        %v165 = vsub.f32 %v162, %v140
        %v166 = vsub.f32 %v156, %v141
        %171 = vrot.lane.b32.xlu0 %v163, 127
        %v172 = vpop.permute.xlu0 %171
        %173 = vrot.lane.b32.xlu0 %v164, 127
        %v174 = vpop.permute.xlu0 %173
        %175 = vrot.lane.b32.xlu0 %v165, 127
        %v176 = vpop.permute.xlu0 %175
        %177 = vrot.lane.b32.xlu0 %v166, 127
        %v178 = vpop.permute.xlu0 %177
        %183 = vrot.lane.b32.xlu0 %v163, 1
        %v184 = vpop.permute.xlu0 %183
        %185 = vrot.lane.b32.xlu0 %v164, 1
        %v186 = vpop.permute.xlu0 %185
        %187 = vrot.lane.b32.xlu0 %v165, 1
        %v188 = vpop.permute.xlu0 %187
        %189 = vrot.lane.b32.xlu0 %v166, 1
        %v190 = vpop.permute.xlu0 %189
        %vm195 = vcmask 7168
        %v196 = vsel %vm195, %v172, %v184
        %v197 = vsel %vm195, %v174, %v186
        %v198 = vsel %vm195, %v176, %v188
        %v199 = vsel %vm195, %v178, %v190
        %v200 = vsub.f32 %v196, %v163
        %v201 = vsub.f32 %v197, %v164
        %v202 = vsub.f32 %v198, %v165
        %v203 = vsub.f32 %v199, %v166
        %vm204 = vcmask 130048
        %205 = vst.msk [vmem:[%s135] sm:$0xff] %vm204, %v200
        %206 = vst.msk [vmem:[%s135 + $0x8] sm:$0xff] %vm204, %v201
        %207 = vst.msk [vmem:[%s135 + $0x10] sm:$0xff] %vm204, %v202
        %208 = vst.msk [vmem:[%s135 + $0x18] sm:$0xff] %vm204, %v203
        %s209 = sand.u32 %s52, 1
        %s210 = scalar_lea.sflag [#allocation4], %s209
        %s211 = sand.u32 %s52, 1
        %s212 = smul.addr %s211, 32
        %s213 = scalar_lea.vmem [#allocation5], %s212
        // Predicated region
        $region29: #{tpu_custom_call.1} parent=23 // pred_check
          %p214 = pneg %p62
        $region30: #{tpu_custom_call.1} parent=23 // pred_check_branch
          %216 = sbr.rel (%p214) target = $region32
        $region31: #{tpu_custom_call.1} parent=23 // pred_region
          %s217 = smul.u32 2, %s18
          %s219 = ssub.s32 512, 512
          %220 = vsyncadd %s210, %s219
          %s221 = smul.addr %s217, 2
          %s222 = smul.addr %s221, 128
          %s223 = scalar_lea.hbm %s1, %s222
          %s224 = sshll.u32 %s213, 4
          %s225 = int_to_ptr.vmem [resolvable:$true] %s224
          %230 = dma.vmem_to_hbm [thread:$0]  %s225, 512, %s223, %s210, 128, 128, 8
        $region32: #{tpu_custom_call.1} parent=23 // pred_fallthru
          _
      $region24: #{tpu_custom_call.1} parent=5 // pred_fallthru
        _
      %p231 = scmp.le.s32.totalorder 2, %s13
      // Predicated region
      $region33: #{tpu_custom_call.1} parent=5 // pred_check
        %p232 = pneg %p231
      $region34: #{tpu_custom_call.1} parent=5 // pred_check_branch
        %234 = sbr.rel (%p232) target = $region36
      $region35: #{tpu_custom_call.1} parent=5 // pred_region
        %s235 = ssub.s32 %s13, 2
        // Predicated region
        $region37: #{tpu_custom_call.1} parent=35 // pred_check
          %p236 = pneg %p68
        $region38: #{tpu_custom_call.1} parent=35 // pred_check_branch
          %238 = sbr.rel (%p236) target = $region40
        $region39: #{tpu_custom_call.1} parent=35 // pred_region
          %s239 = sand.u32 %s53, 1
          %s240 = scalar_lea.sflag [#allocation4], %s239
          %s241 = sand.u32 %s53, 1
          %s242 = smul.addr %s241, 32
          %s243 = scalar_lea.vmem [#allocation5], %s242
          %244 = dma.done %s240, 512
        $region40: #{tpu_custom_call.1} parent=35 // pred_fallthru
          _
      $region36: #{tpu_custom_call.1} parent=5 // pred_fallthru
        _
    $region6: #{tpu_custom_call.1} parent=1 // loop_footer
      %s17 = sadd.s32 1, %s13
    $region7: #{tpu_custom_call.1} parent=1 // loop_footer_branch
      %12 = sbr.rel target = $region3
    $region8: #{tpu_custom_call.1} parent=1 // loop_exit
      _
    %245 = vsyncpa [#allocation3], 1
    %s246 = scalar_lea.sflag [#allocation3], 1
    %247 = vsyncpa %s246, 1
    %248 = vsyncpa [#allocation4], 1
    %s249 = scalar_lea.sflag [#allocation4], 1
    %250 = vsyncpa %s249, 1

</llo_original>
